<compile_context>
chip_gen: v7x
topology: tpu7x:2x2x1
jax: 0.10.0
libtpu: 0.0.40
codegen_flags: <defaults>
</compile_context>

<pallas_src>
import jax
import jax.numpy as jnp
from jax.experimental import pallas as pl
from jax.experimental.pallas import tpu as pltpu


def _softmax_body_kernel(t_ref, x_ref, u_ref, act_ref):
    """One (TB, A) row-block: Gumbel-max sample of softmax(x * T)."""
    T = t_ref[0]                                     # SMEM scalar temperature
    x = x_ref[...].astype(jnp.float32)               # (TB, A) logits
    u = u_ref[...]                                   # (TB, A) uniforms in (0, 1)

    # Gumbel(0,1) noise: g = -log(-log(u)).  Both logs go to the EUP slot.
    g = -jnp.log(-jnp.log(u))
    z = x * T + g                                    # perturbed logits

    A = z.shape[-1]

    # argmax over the action (lane) axis, expressed as max + first-index-of-max
    # (ties have probability zero under continuous Gumbel noise).
    m = jnp.max(z, axis=-1, keepdims=True)                       # (TB, 1)
    col = jax.lax.broadcasted_iota(jnp.int32, z.shape, 1)        # column indices
    cand = jnp.where(z >= m, col, A)                             # A = "not the max"
    action = jnp.min(cand, axis=-1, keepdims=True)               # (TB, 1) int32

    act_ref[...] = jnp.minimum(action, A - 1).astype(jnp.int32)


def softmax_body(outputs, key, T, block_rows=512):
    """actions = multinomial(softmax(outputs * T), 1) via Gumbel-max. Returns (B, 1) int32."""
    B, A = outputs.shape

    # Per-element uniform noise in (0, 1); minval keeps log(u) finite.
    u = jax.random.uniform(key, (B, A), dtype=jnp.float32,
                           minval=1e-12, maxval=1.0)
    t_arr = jnp.asarray([T], dtype=jnp.float32)

    # Row-block size: whole batch if small (block == full dims is always legal),
    # otherwise 512 rows (multiple of 8 sublanes, comfortably inside scoped VMEM
    # on v7x even with two double-buffered f32 input tiles).
    TB = B if B <= block_rows else block_rows
    nb = pl.cdiv(B, TB)

    return pl.pallas_call(
        _softmax_body_kernel,
        out_shape=jax.ShapeDtypeStruct((B, 1), jnp.int32),
        grid=(nb,),
        in_specs=[
            pl.BlockSpec(memory_space=pltpu.MemorySpace.SMEM),   # T scalar
            pl.BlockSpec((TB, A), lambda i: (i, 0)),             # logits block
            pl.BlockSpec((TB, A), lambda i: (i, 0)),             # uniform block
        ],
        out_specs=pl.BlockSpec((TB, 1), lambda i: (i, 0)),
        compiler_params=pltpu.CompilerParams(
            dimension_semantics=("parallel",)),                  # megacore on v7x
    )(t_arr, outputs, u)


if __name__ == "__main__":
    key = jax.random.PRNGKey(0)
    k_logits, k_sample = jax.random.split(key)

    B, A = 2, 8          # batch of Q-value rows, 8 possible actions
    T = 7.0              # temperature, as in SoftmaxBody(T=7)

    outputs = jax.random.normal(k_logits, (B, A), dtype=jnp.float32)

    actions = softmax_body(outputs, k_sample, T)
    actions = jax.block_until_ready(actions)

    assert actions.shape == (B, 1)
    assert actions.dtype == jnp.int32
    assert bool(jnp.all(actions >= 0)) and bool(jnp.all(actions < A))
    print("KERNEL_OK")
</pallas_src>

<mosaic_0001>
module attributes {stable_mosaic.version = 11 : i64} {
  func.func @_softmax_body_kernel(%arg0: i32, %arg1: memref<1xf32, #tpu.memory_space<smem>>, %arg2: memref<2x8xf32, #tpu.memory_space<vmem>>, %arg3: memref<2x8xf32, #tpu.memory_space<vmem>>, %arg4: memref<2x1xi32, #tpu.memory_space<vmem>>) attributes {dimension_semantics = [#tpu.dimension_semantics<parallel>], iteration_bounds = array<i64: 1>, scalar_prefetch = 0 : i64, scratch_operands = 0 : i64, tpu.core_type = #tpu.core_type<tc>, window_params = [{transform_indices = @transform_0, window_bounds = array<i64: 1>}, {transform_indices = @transform_1, window_bounds = array<i64: 2, 8>}, {transform_indices = @transform_2, window_bounds = array<i64: 2, 8>}, {transform_indices = @transform_3, window_bounds = array<i64: 2, 1>}]} {
    %c0 = arith.constant 0 : index
    %0 = memref.load %arg1[%c0] : memref<1xf32, #tpu.memory_space<smem>>
    %c0_0 = arith.constant 0 : index
    %c0_1 = arith.constant 0 : index
    %1 = vector.load %arg2[%c0_0, %c0_1] : memref<2x8xf32, #tpu.memory_space<vmem>>, vector<2x8xf32>
    %c0_2 = arith.constant 0 : index
    %c0_3 = arith.constant 0 : index
    %2 = vector.load %arg3[%c0_2, %c0_3] : memref<2x8xf32, #tpu.memory_space<vmem>>, vector<2x8xf32>
    %3 = math.log %2 : vector<2x8xf32>
    %cst = arith.constant 0.000000e+00 : f32
    %4 = vector.broadcast %cst : f32 to vector<2x8xf32>
    %5 = arith.subf %4, %3 : vector<2x8xf32>
    %6 = math.log %5 : vector<2x8xf32>
    %cst_4 = arith.constant 0.000000e+00 : f32
    %7 = vector.broadcast %cst_4 : f32 to vector<2x8xf32>
    %8 = arith.subf %7, %6 : vector<2x8xf32>
    %9 = vector.broadcast %0 : f32 to vector<2x8xf32>
    %10 = arith.mulf %1, %9 : vector<2x8xf32>
    %11 = arith.addf %10, %8 : vector<2x8xf32>
    %cst_5 = arith.constant dense<0xFF800000> : vector<2xf32>
    %12 = vector.multi_reduction <maximumf>, %11, %cst_5 [1] : vector<2x8xf32> to vector<2xf32>
    %13 = vector.shape_cast %12 : vector<2xf32> to vector<2x1xf32>
    %14 = tpu.iota {dimensions = array<i32: 1>} : vector<2x8xi32>
    %15 = vector.broadcast %13 : vector<2x1xf32> to vector<2x8xf32>
    %16 = arith.cmpf oge, %11, %15 : vector<2x8xf32>
    %c8_i32 = arith.constant 8 : i32
    %17 = vector.broadcast %c8_i32 : i32 to vector<2x8xi32>
    %18 = arith.select %16, %14, %17 : vector<2x8xi1>, vector<2x8xi32>
    %cst_6 = arith.constant dense<2147483647> : vector<2xi32>
    %19 = vector.multi_reduction <minsi>, %18, %cst_6 [1] : vector<2x8xi32> to vector<2xi32>
    %20 = vector.shape_cast %19 : vector<2xi32> to vector<2x1xi32>
    %c7_i32 = arith.constant 7 : i32
    %21 = vector.broadcast %c7_i32 : i32 to vector<2x1xi32>
    %22 = arith.minsi %20, %21 : vector<2x1xi32>
    %c0_7 = arith.constant 0 : index
    %c0_8 = arith.constant 0 : index
    %23 = vector.load %arg4[%c0_7, %c0_8] : memref<2x1xi32, #tpu.memory_space<vmem>>, vector<2x1xi32>
    tpu.vector_store %arg4[%c0_7, %c0_8], %22 {strides = array<i32>} : memref<2x1xi32, #tpu.memory_space<vmem>>, vector<2x1xi32>,
    return
  }
  func.func @transform_0(%arg0: i32) -> i32 {
    %c0_i32 = arith.constant 0 : i32
    %c0_i32_0 = arith.constant 0 : i32
    return %c0_i32 : i32
  }
  func.func @transform_1(%arg0: i32) -> (i32, i32) {
    %c0_i32 = arith.constant 0 : i32
    %c0_i32_0 = arith.constant 0 : i32
    return %arg0, %c0_i32 : i32, i32
  }
  func.func @transform_2(%arg0: i32) -> (i32, i32) {
    %c0_i32 = arith.constant 0 : i32
    %c0_i32_0 = arith.constant 0 : i32
    return %arg0, %c0_i32 : i32, i32
  }
  func.func @transform_3(%arg0: i32) -> (i32, i32) {
    %c0_i32 = arith.constant 0 : i32
    %c0_i32_0 = arith.constant 0 : i32
    return %arg0, %c0_i32 : i32, i32
  }
}

</mosaic_0001>

<llo_original>
// kernel: tpu_custom_call.1
$region0: #{tpu_custom_call.1}
  #allocation0 [shape = 'u32[]', space=smem, size = 0x4, offset = 0x4, fixed_abs, tag = 'smem constant byte address 0x4 - core index']
  #allocation1 [shape = 'u32[144,128]{1,0:T(1,128)}', space=vmem, size = 0x12000, scoped, tag = 'internal scratch']
  #allocation2 [shape = 'f32[1]{0:T(128)S(6)}', space=smem, size = 0x200, scoped, tag = 'scoped memory for tpu_custom_call.1']
  %s0 = inlined_call_operand.<no memory space> [shape: f32[1], index: 0, kind: input, shape index: {}]
  %s1 = inlined_call_operand.vmem [shape: f32[2,8], index: 1, kind: input, shape index: {}]
  %s2 = inlined_call_operand.vmem [shape: f32[2,8], index: 2, kind: input, shape index: {}]
  %s3 = inlined_call_operand.vmem [shape: s32[2,1], index: 3, kind: output, shape index: {}]
  %s4 = sld [smem:[#allocation0]]
  $region22: #{tpu_custom_call.1} parent=0
    _
  %s6 = ssub.s32 1, %s4
  %s7 = scalar_select 0, %s6, %s4
  %8 = sst [smem:[#allocation2]] %s0
  // Predicated region
  $region2: #{tpu_custom_call.1} parent=0 // pred_check
    _
  $region3: #{tpu_custom_call.1} parent=0 // pred_check_branch
    %10 = sbr.rel (0) target = $region5
  $region4: #{tpu_custom_call.1} parent=0 // pred_region
    _
  $region5: #{tpu_custom_call.1} parent=0 // pred_fallthru
    _
  // Predicated region
  $region6: #{tpu_custom_call.1} parent=0 // pred_check
    _
  $region7: #{tpu_custom_call.1} parent=0 // pred_check_branch
    %12 = sbr.rel (0) target = $region9
  $region8: #{tpu_custom_call.1} parent=0 // pred_region
    _
  $region9: #{tpu_custom_call.1} parent=0 // pred_fallthru
    _
  // Predicated region
  $region10: #{tpu_custom_call.1} parent=0 // pred_check
    _
  $region11: #{tpu_custom_call.1} parent=0 // pred_check_branch
    %14 = sbr.rel (0) target = $region13
  $region12: #{tpu_custom_call.1} parent=0 // pred_region
    _
  $region13: #{tpu_custom_call.1} parent=0 // pred_fallthru
    _
  %s15 = sld [smem:[#allocation2]]
  %v16 = vld [vmem:[%s1] sm:$0x3]
  %v17 = vld [vmem:[%s2] sm:$0x3]
  %v18 = vlog2.pop %v17
  %v19 = vmul.f32 %v18, 0.6931472
  %v20 = vsub.f32 0.0, %v19
  %v21 = vlog2.pop %v20
  %v22 = vmul.f32 %v21, 0.6931472
  %v23 = vsub.f32 0.0, %v22
  %v24 = vstv %s15
  %v25 = vmul.f32 %v16, %v24
  %v26 = vadd.f32 %v25, %v23
  %vm27 = vcmask 58368
  %v28 = vsel %vm27, %v26, -inf
  %29 = vmax.xlane.f32.xlu0 %v28
  %v30 = vpop.xlane.xlu0 %29
  %v31 = vlaneseq
  %v32 = vand.u32 %v31, 127
  %vm33 = vcmp.ge.f32.partialorder %v26, %v30
  %v34 = vsel %vm33, %v32, 8
  %v35 = vsel %vm27, %v34, 2147483647
  %v36 = vand.u32 %v35, 65535
  %v37 = vshra.s32 %v35, 16
  %v38 = vcvt.s32.f32 %v36
  %v39 = vcvt.s32.f32 %v37
  %40 = vmin.xlane.f32.xlu0 %v39
  %v41 = vpop.xlane.xlu0 %40
  %vm42 = vcmp.eq.f32.partialorder %v39, %v41
  %v43 = vsel %vm42, %v38, inf
  %44 = vmin.xlane.f32.xlu0 %v43
  %v45 = vpop.xlane.xlu0 %44
  %v46 = vcvt.f32.s32 %v45
  %v47 = vcvt.f32.s32 %v41
  %v48 = vshll.u32 %v47, 16
  %v49 = vadd.s32 %v48, %v46
  %vm50 = vcmp.lt.s32.totalorder %v49, 7
  %v51 = vsel %vm50, %v49, 7
  %vm52 = vcmask 1024
  %53 = vst.msk [vmem:[%s3] sm:$0x3] %vm52, %v51
  // Predicated region
  $region14: #{tpu_custom_call.1} parent=0 // pred_check
    _
  $region15: #{tpu_custom_call.1} parent=0 // pred_check_branch
    %55 = sbr.rel (0) target = $region17
  $region16: #{tpu_custom_call.1} parent=0 // pred_region
    _
  $region17: #{tpu_custom_call.1} parent=0 // pred_fallthru
    _
  // Predicated region
  $region18: #{tpu_custom_call.1} parent=0 // pred_check
    _
  $region19: #{tpu_custom_call.1} parent=0 // pred_check_branch
    %57 = sbr.rel (0) target = $region21
  $region20: #{tpu_custom_call.1} parent=0 // pred_region
    _
  $region21: #{tpu_custom_call.1} parent=0 // pred_fallthru
    _

</llo_original>
